<compile_context>
chip_gen: v7x
topology: tpu7x:2x2x1
jax: 0.10.0
libtpu: 0.0.40
codegen_flags: <defaults>
</compile_context>

<pallas_src>
import math

import jax
import jax.numpy as jnp
from jax.experimental import pallas as pl
from jax.experimental.pallas import tpu as pltpu

LANE = 128                # TPU lane width; feature axes padded to multiples
DEFAULT_BLOCK_BATCH = 512 # target batch tile (sweepable)


def _round_up(n, m):
    return ((n + m - 1) // m) * m


def _layer_dims(input_dim):
    return [input_dim, 128, 64, 32, 64, 128, input_dim]


def _vmem_cap_bytes():
    """Physical VMEM of the local chip (fallback 128 MiB if query fails)."""
    try:
        info = pltpu.get_tpu_info()
        cap = getattr(info, "vmem_capacity_bytes", None)
        if cap:
            return int(cap)
    except Exception:
        pass
    return 128 << 20


# --------------------------------------------------------------------------
# Kernels
# --------------------------------------------------------------------------
def _ae_kernel_packed(x_ref, w_ref, b_ref, out_ref):
    """All padded widths == 128: weights packed as (6,128,128) bf16,
    biases as (6,1,128) f32.  One batch tile per grid step."""
    h = x_ref[...]                                   # bf16 (BT, 128)
    for i in range(6):
        # bf16 MXU operands, f32 accumulation; bias-add + ReLU in f32.
        h = jnp.dot(h.astype(jnp.bfloat16), w_ref[i],
                    preferred_element_type=jnp.float32)
        h = jnp.maximum(h + b_ref[i], 0.0)           # nn.ReLU
    out_ref[...] = h                                 # f32 (BT, 128)


def _ae_kernel_flat(x_ref, *refs):
    """Generic path (D padded > 128): refs = (w1, b1, ..., w6, b6, out)."""
    out_ref = refs[-1]
    prm = refs[:-1]
    h = x_ref[...]                                   # bf16 (BT, Dp)
    for i in range(len(prm) // 2):
        h = jnp.dot(h.astype(jnp.bfloat16), prm[2 * i][...],
                    preferred_element_type=jnp.float32)
        h = jnp.maximum(h + prm[2 * i + 1][...], 0.0)
    out_ref[...] = h.astype(out_ref.dtype)


# --------------------------------------------------------------------------
# Parameter pre-packing (hoisted out of the forward path; run once)
# --------------------------------------------------------------------------
def prepare_params(params, input_dim):
    """params: flat [w1, b1, ..., w6, b6] with weights stored as (in, out)
    (== PyTorch (out, in) transposed).  Returns padded bf16/f32 tensors."""
    dims = _layer_dims(input_dim)
    dims_p = [_round_up(max(d, LANE), LANE) for d in dims]

    if all(dp == LANE for dp in dims_p):
        # Pack: one (6,128,128) bf16 weight tensor + one (6,1,128) f32 bias.
        w_all = jnp.zeros((6, LANE, LANE), jnp.bfloat16)
        b_all = jnp.zeros((6, 1, LANE), jnp.float32)
        for i in range(6):
            fi, fo = dims[i], dims[i + 1]
            w_all = w_all.at[i, :fi, :fo].set(params[2 * i].astype(jnp.bfloat16))
            b_all = b_all.at[i, 0, :fo].set(
                params[2 * i + 1].reshape(fo).astype(jnp.float32))
        return (w_all, b_all)

    # Generic path: per-layer padded tensors.
    out = []
    for i in range(6):
        fi, fo = dims[i], dims[i + 1]
        fip, fop = dims_p[i], dims_p[i + 1]
        w_p = jnp.zeros((fip, fop), jnp.bfloat16).at[:fi, :fo].set(
            params[2 * i].astype(jnp.bfloat16))
        b_p = jnp.zeros((1, fop), jnp.float32).at[:, :fo].set(
            params[2 * i + 1].reshape(1, fo).astype(jnp.float32))
        out += [w_p, b_p]
    return tuple(out)


# --------------------------------------------------------------------------
# Forward wrapper
# --------------------------------------------------------------------------
def layerwise_autoencoder_forward(x, prepared, *, block_batch=DEFAULT_BLOCK_BATCH):
    """x: (B, D) float32.  prepared: output of prepare_params."""
    B, D = x.shape
    dims = _layer_dims(D)
    dims_p = [_round_up(max(d, LANE), LANE) for d in dims]
    Dp = dims_p[0]

    # Batch tile: large enough to amortize the ~0.35us per-grid-step overhead,
    # but guarantee >= 2 grid steps when B allows (v7x megacore sharding).
    half = -(-B // 2)                                       # ceil(B/2)
    BT = max(LANE, min(block_batch, _round_up(half, LANE)))
    Bp = _round_up(B, BT)

    # Single fused pad+cast pass: bf16 input, zero-padded batch & features.
    x_p = x.astype(jnp.bfloat16)
    if Bp != B or Dp != D:
        x_p = jnp.pad(x_p, ((0, Bp - B), (0, Dp - D)))

    grid = (Bp // BT,)
    x_spec = pl.BlockSpec((BT, Dp), lambda i: (i, 0))
    out_spec = pl.BlockSpec((BT, Dp), lambda i: (i, 0))

    packed = (len(prepared) == 2)
    if packed:
        kernel = _ae_kernel_packed
        w_all, b_all = prepared
        operands = (x_p, w_all, b_all)
        # Constant index_maps -> weights/biases DMA'd once, VMEM-resident.
        in_specs = [x_spec,
                    pl.BlockSpec(w_all.shape, lambda i: (0, 0, 0)),
                    pl.BlockSpec(b_all.shape, lambda i: (0, 0, 0))]
        param_bytes = int(w_all.size) * 2 + int(b_all.size) * 4
    else:
        kernel = _ae_kernel_flat
        operands = (x_p,) + tuple(prepared)
        in_specs = [x_spec]
        param_bytes = 0
        for p in prepared:
            in_specs.append(
                pl.BlockSpec(p.shape, lambda i, n=len(p.shape): (0,) * n))
            param_bytes += int(p.size) * p.dtype.itemsize

    # VMEM budget: x tiles (bf16, x2 buffers) + out tiles (f32, x2 buffers)
    # + resident params (x2 slack) + ~2 live f32 layer intermediates.
    max_w = max(max(dims_p), LANE)
    vmem_bytes = (2 * BT * Dp * 2
                  + 2 * BT * Dp * 4
                  + 2 * param_bytes
                  + 2 * BT * max_w * 4)
    cap = _vmem_cap_bytes()
    vmem_limit = int(min(max(vmem_bytes + (8 << 20), 32 << 20),
                         int(cap * 0.80)))   # ~51 MiB on v7x, ~102 MiB on v5e/v6e

    # Honest (unpadded) scheduler hint.
    flops = sum(2 * B * dims[i] * dims[i + 1] for i in range(6))
    bytes_accessed = B * D * 2 + B * D * 4 + param_bytes

    out_p = pl.pallas_call(
        kernel,
        out_shape=jax.ShapeDtypeStruct((Bp, Dp), jnp.float32),
        grid=grid,
        in_specs=in_specs,
        out_specs=out_spec,
        compiler_params=pltpu.CompilerParams(
            dimension_semantics=("parallel",),
            vmem_limit_bytes=vmem_limit),
        cost_estimate=pl.CostEstimate(
            flops=flops, transcendentals=0, bytes_accessed=bytes_accessed),
    )(*operands)

    if Bp != B or Dp != D:
        out_p = out_p[:B, :D]
    return out_p


# --------------------------------------------------------------------------
# Init + pure-JAX reference (same bf16-operand / f32-accumulate recipe)
# --------------------------------------------------------------------------
def init_params(key, input_dim):
    """Deterministic init mirroring nn.Linear's default U(-1/sqrt(fan_in), +)."""
    dims = _layer_dims(input_dim)
    params = []
    for i in range(len(dims) - 1):
        fan_in, fan_out = dims[i], dims[i + 1]
        key, kw, kb = jax.random.split(key, 3)
        bound = 1.0 / math.sqrt(fan_in)
        # stored as (in, out) == PyTorch weight (out, in) transposed
        w = jax.random.uniform(kw, (fan_in, fan_out), jnp.float32, -bound, bound)
        b = jax.random.uniform(kb, (fan_out,), jnp.float32, -bound, bound)
        params += [w, b]
    return params


def reference_forward(x, params):
    h = x.astype(jnp.bfloat16)
    for i in range(len(params) // 2):
        w = params[2 * i].astype(jnp.bfloat16)
        b = params[2 * i + 1].reshape(1, -1).astype(jnp.float32)
        h = jnp.dot(h.astype(jnp.bfloat16), w,
                    preferred_element_type=jnp.float32) + b
        h = jnp.maximum(h, 0.0)
    return h


if __name__ == "__main__":
    key = jax.random.PRNGKey(0)
    k_param, k_x1, k_x2 = jax.random.split(key, 3)

    input_dim = 64
    params = init_params(k_param, input_dim)
    prepared = prepare_params(params, input_dim)          # pad/cast once

    fwd = jax.jit(layerwise_autoencoder_forward)

    # Small test consistent with the module.
    x_small = jax.random.normal(k_x1, (8, input_dim), jnp.float32)
    out_small = jax.block_until_ready(fwd(x_small, prepared))
    ref_small = reference_forward(x_small, params)
    assert out_small.shape == x_small.shape
    assert jnp.allclose(out_small, ref_small, atol=1e-3, rtol=1e-3), "mismatch (small)"

    # Multi-tile grid path (2 steps), batch not a multiple of the tile.
    x_big = jax.random.normal(k_x2, (300, input_dim), jnp.float32)
    out_big = jax.block_until_ready(fwd(x_big, prepared))
    ref_big = reference_forward(x_big, params)
    assert out_big.shape == x_big.shape
    assert jnp.allclose(out_big, ref_big, atol=1e-3, rtol=1e-3), "mismatch (big)"

    print("KERNEL_OK")
</pallas_src>

<mosaic_0001>
module attributes {stable_mosaic.version = 11 : i64} {
  func.func @_ae_kernel_packed(%arg0: i32, %arg1: memref<128x128xbf16, #tpu.memory_space<vmem>>, %arg2: memref<6x128x128xbf16, #tpu.memory_space<vmem>>, %arg3: memref<6x1x128xf32, #tpu.memory_space<vmem>>, %arg4: memref<128x128xf32, #tpu.memory_space<vmem>>) attributes {dimension_semantics = [#tpu.dimension_semantics<parallel>], iteration_bounds = array<i64: 1>, scalar_prefetch = 0 : i64, scratch_operands = 0 : i64, tpu.core_type = #tpu.core_type<tc>, window_params = [{transform_indices = @transform_0, window_bounds = array<i64: 128, 128>}, {pipeline_mode = #tpu.pipeline_mode<synchronous>, transform_indices = @transform_1, window_bounds = array<i64: 6, 128, 128>}, {pipeline_mode = #tpu.pipeline_mode<synchronous>, transform_indices = @transform_2, window_bounds = array<i64: 6, 1, 128>}, {transform_indices = @transform_3, window_bounds = array<i64: 128, 128>}]} {
    %c0 = arith.constant 0 : index
    %c0_0 = arith.constant 0 : index
    %0 = vector.load %arg1[%c0, %c0_0] : memref<128x128xbf16, #tpu.memory_space<vmem>>, vector<128x128xbf16>
    %c0_1 = arith.constant 0 : index
    %c0_2 = arith.constant 0 : index
    %c0_3 = arith.constant 0 : index
    %1 = vector.load %arg2[%c0_1, %c0_2, %c0_3] : memref<6x128x128xbf16, #tpu.memory_space<vmem>>, vector<1x128x128xbf16>
    %2 = vector.shape_cast %1 : vector<1x128x128xbf16> to vector<128x128xbf16>
    %cst = arith.constant dense<0.000000e+00> : vector<128x128xf32>
    %3 = tpu.matmul %0, %2, %cst {dimension_numbers = #tpu.dot_dimension_numbers<[1], [0], [0], [1], [0, 0, 1, 1], [], []>} : vector<128x128xbf16>, vector<128x128xbf16>, vector<128x128xf32> -> vector<128x128xf32>
    %c0_4 = arith.constant 0 : index
    %c0_5 = arith.constant 0 : index
    %c0_6 = arith.constant 0 : index
    %4 = vector.load %arg3[%c0_4, %c0_5, %c0_6] : memref<6x1x128xf32, #tpu.memory_space<vmem>>, vector<1x1x128xf32>
    %5 = vector.shape_cast %4 : vector<1x1x128xf32> to vector<1x128xf32>
    %6 = vector.broadcast %5 : vector<1x128xf32> to vector<128x128xf32>
    %7 = arith.addf %3, %6 : vector<128x128xf32>
    %cst_7 = arith.constant 0.000000e+00 : f32
    %8 = vector.broadcast %cst_7 : f32 to vector<128x128xf32>
    %9 = arith.maximumf %7, %8 : vector<128x128xf32>
    %10 = arith.truncf %9 : vector<128x128xf32> to vector<128x128xbf16>
    %c1 = arith.constant 1 : index
    %c0_8 = arith.constant 0 : index
    %c0_9 = arith.constant 0 : index
    %11 = vector.load %arg2[%c1, %c0_8, %c0_9] : memref<6x128x128xbf16, #tpu.memory_space<vmem>>, vector<1x128x128xbf16>
    %12 = vector.shape_cast %11 : vector<1x128x128xbf16> to vector<128x128xbf16>
    %cst_10 = arith.constant dense<0.000000e+00> : vector<128x128xf32>
    %13 = tpu.matmul %10, %12, %cst_10 {dimension_numbers = #tpu.dot_dimension_numbers<[1], [0], [0], [1], [0, 0, 1, 1], [], []>} : vector<128x128xbf16>, vector<128x128xbf16>, vector<128x128xf32> -> vector<128x128xf32>
    %c1_11 = arith.constant 1 : index
    %c0_12 = arith.constant 0 : index
    %c0_13 = arith.constant 0 : index
    %14 = vector.load %arg3[%c1_11, %c0_12, %c0_13] : memref<6x1x128xf32, #tpu.memory_space<vmem>>, vector<1x1x128xf32>
    %15 = vector.shape_cast %14 : vector<1x1x128xf32> to vector<1x128xf32>
    %16 = vector.broadcast %15 : vector<1x128xf32> to vector<128x128xf32>
    %17 = arith.addf %13, %16 : vector<128x128xf32>
    %cst_14 = arith.constant 0.000000e+00 : f32
    %18 = vector.broadcast %cst_14 : f32 to vector<128x128xf32>
    %19 = arith.maximumf %17, %18 : vector<128x128xf32>
    %20 = arith.truncf %19 : vector<128x128xf32> to vector<128x128xbf16>
    %c2 = arith.constant 2 : index
    %c0_15 = arith.constant 0 : index
    %c0_16 = arith.constant 0 : index
    %21 = vector.load %arg2[%c2, %c0_15, %c0_16] : memref<6x128x128xbf16, #tpu.memory_space<vmem>>, vector<1x128x128xbf16>
    %22 = vector.shape_cast %21 : vector<1x128x128xbf16> to vector<128x128xbf16>
    %cst_17 = arith.constant dense<0.000000e+00> : vector<128x128xf32>
    %23 = tpu.matmul %20, %22, %cst_17 {dimension_numbers = #tpu.dot_dimension_numbers<[1], [0], [0], [1], [0, 0, 1, 1], [], []>} : vector<128x128xbf16>, vector<128x128xbf16>, vector<128x128xf32> -> vector<128x128xf32>
    %c2_18 = arith.constant 2 : index
    %c0_19 = arith.constant 0 : index
    %c0_20 = arith.constant 0 : index
    %24 = vector.load %arg3[%c2_18, %c0_19, %c0_20] : memref<6x1x128xf32, #tpu.memory_space<vmem>>, vector<1x1x128xf32>
    %25 = vector.shape_cast %24 : vector<1x1x128xf32> to vector<1x128xf32>
    %26 = vector.broadcast %25 : vector<1x128xf32> to vector<128x128xf32>
    %27 = arith.addf %23, %26 : vector<128x128xf32>
    %cst_21 = arith.constant 0.000000e+00 : f32
    %28 = vector.broadcast %cst_21 : f32 to vector<128x128xf32>
    %29 = arith.maximumf %27, %28 : vector<128x128xf32>
    %30 = arith.truncf %29 : vector<128x128xf32> to vector<128x128xbf16>
    %c3 = arith.constant 3 : index
    %c0_22 = arith.constant 0 : index
    %c0_23 = arith.constant 0 : index
    %31 = vector.load %arg2[%c3, %c0_22, %c0_23] : memref<6x128x128xbf16, #tpu.memory_space<vmem>>, vector<1x128x128xbf16>
    %32 = vector.shape_cast %31 : vector<1x128x128xbf16> to vector<128x128xbf16>
    %cst_24 = arith.constant dense<0.000000e+00> : vector<128x128xf32>
    %33 = tpu.matmul %30, %32, %cst_24 {dimension_numbers = #tpu.dot_dimension_numbers<[1], [0], [0], [1], [0, 0, 1, 1], [], []>} : vector<128x128xbf16>, vector<128x128xbf16>, vector<128x128xf32> -> vector<128x128xf32>
    %c3_25 = arith.constant 3 : index
    %c0_26 = arith.constant 0 : index
    %c0_27 = arith.constant 0 : index
    %34 = vector.load %arg3[%c3_25, %c0_26, %c0_27] : memref<6x1x128xf32, #tpu.memory_space<vmem>>, vector<1x1x128xf32>
    %35 = vector.shape_cast %34 : vector<1x1x128xf32> to vector<1x128xf32>
    %36 = vector.broadcast %35 : vector<1x128xf32> to vector<128x128xf32>
    %37 = arith.addf %33, %36 : vector<128x128xf32>
    %cst_28 = arith.constant 0.000000e+00 : f32
    %38 = vector.broadcast %cst_28 : f32 to vector<128x128xf32>
    %39 = arith.maximumf %37, %38 : vector<128x128xf32>
    %40 = arith.truncf %39 : vector<128x128xf32> to vector<128x128xbf16>
    %c4 = arith.constant 4 : index
    %c0_29 = arith.constant 0 : index
    %c0_30 = arith.constant 0 : index
    %41 = vector.load %arg2[%c4, %c0_29, %c0_30] : memref<6x128x128xbf16, #tpu.memory_space<vmem>>, vector<1x128x128xbf16>
    %42 = vector.shape_cast %41 : vector<1x128x128xbf16> to vector<128x128xbf16>
    %cst_31 = arith.constant dense<0.000000e+00> : vector<128x128xf32>
    %43 = tpu.matmul %40, %42, %cst_31 {dimension_numbers = #tpu.dot_dimension_numbers<[1], [0], [0], [1], [0, 0, 1, 1], [], []>} : vector<128x128xbf16>, vector<128x128xbf16>, vector<128x128xf32> -> vector<128x128xf32>
    %c4_32 = arith.constant 4 : index
    %c0_33 = arith.constant 0 : index
    %c0_34 = arith.constant 0 : index
    %44 = vector.load %arg3[%c4_32, %c0_33, %c0_34] : memref<6x1x128xf32, #tpu.memory_space<vmem>>, vector<1x1x128xf32>
    %45 = vector.shape_cast %44 : vector<1x1x128xf32> to vector<1x128xf32>
    %46 = vector.broadcast %45 : vector<1x128xf32> to vector<128x128xf32>
    %47 = arith.addf %43, %46 : vector<128x128xf32>
    %cst_35 = arith.constant 0.000000e+00 : f32
    %48 = vector.broadcast %cst_35 : f32 to vector<128x128xf32>
    %49 = arith.maximumf %47, %48 : vector<128x128xf32>
    %50 = arith.truncf %49 : vector<128x128xf32> to vector<128x128xbf16>
    %c5 = arith.constant 5 : index
    %c0_36 = arith.constant 0 : index
    %c0_37 = arith.constant 0 : index
    %51 = vector.load %arg2[%c5, %c0_36, %c0_37] : memref<6x128x128xbf16, #tpu.memory_space<vmem>>, vector<1x128x128xbf16>
    %52 = vector.shape_cast %51 : vector<1x128x128xbf16> to vector<128x128xbf16>
    %cst_38 = arith.constant dense<0.000000e+00> : vector<128x128xf32>
    %53 = tpu.matmul %50, %52, %cst_38 {dimension_numbers = #tpu.dot_dimension_numbers<[1], [0], [0], [1], [0, 0, 1, 1], [], []>} : vector<128x128xbf16>, vector<128x128xbf16>, vector<128x128xf32> -> vector<128x128xf32>
    %c5_39 = arith.constant 5 : index
    %c0_40 = arith.constant 0 : index
    %c0_41 = arith.constant 0 : index
    %54 = vector.load %arg3[%c5_39, %c0_40, %c0_41] : memref<6x1x128xf32, #tpu.memory_space<vmem>>, vector<1x1x128xf32>
    %55 = vector.shape_cast %54 : vector<1x1x128xf32> to vector<1x128xf32>
    %56 = vector.broadcast %55 : vector<1x128xf32> to vector<128x128xf32>
    %57 = arith.addf %53, %56 : vector<128x128xf32>
    %cst_42 = arith.constant 0.000000e+00 : f32
    %58 = vector.broadcast %cst_42 : f32 to vector<128x128xf32>
    %59 = arith.maximumf %57, %58 : vector<128x128xf32>
    %c0_43 = arith.constant 0 : index
    %c0_44 = arith.constant 0 : index
    %60 = vector.load %arg4[%c0_43, %c0_44] : memref<128x128xf32, #tpu.memory_space<vmem>>, vector<128x128xf32>
    tpu.vector_store %arg4[%c0_43, %c0_44], %59 {strides = array<i32>} : memref<128x128xf32, #tpu.memory_space<vmem>>, vector<128x128xf32>,
    return
  }
  func.func @transform_0(%arg0: i32) -> (i32, i32) {
    %c0_i32 = arith.constant 0 : i32
    %c0_i32_0 = arith.constant 0 : i32
    return %arg0, %c0_i32 : i32, i32
  }
  func.func @transform_1(%arg0: i32) -> (i32, i32, i32) {
    %c0_i32 = arith.constant 0 : i32
    %c0_i32_0 = arith.constant 0 : i32
    %c0_i32_1 = arith.constant 0 : i32
    %c0_i32_2 = arith.constant 0 : i32
    return %c0_i32, %c0_i32_0, %c0_i32_1 : i32, i32, i32
  }
  func.func @transform_2(%arg0: i32) -> (i32, i32, i32) {
    %c0_i32 = arith.constant 0 : i32
    %c0_i32_0 = arith.constant 0 : i32
    %c0_i32_1 = arith.constant 0 : i32
    %c0_i32_2 = arith.constant 0 : i32
    return %c0_i32, %c0_i32_0, %c0_i32_1 : i32, i32, i32
  }
  func.func @transform_3(%arg0: i32) -> (i32, i32) {
    %c0_i32 = arith.constant 0 : i32
    %c0_i32_0 = arith.constant 0 : i32
    return %arg0, %c0_i32 : i32, i32
  }
}

</mosaic_0001>

<llo_original>
// kernel: layerwise_autoencoder_forward.1
$region0: #{layerwise_autoencoder_forward.1}
  #allocation0 [shape = 'u32[]', space=smem, size = 0x4, offset = 0x4, fixed_abs, tag = 'smem constant byte address 0x4 - core index']
  #allocation1 [shape = 'u32[144,128]{1,0:T(1,128)}', space=vmem, size = 0x12000, scoped, tag = 'internal scratch']
  %s0 = inlined_call_operand.vmem [shape: bf16[128,128], index: 0, kind: input, shape index: {}]
  %s1 = inlined_call_operand.hbm [shape: bf16[6,128,128], index: 1, kind: input, shape index: {}]
  %s2 = inlined_call_operand.vmem [shape: f32[6,1,128], index: 2, kind: input, shape index: {}]
  %s3 = inlined_call_operand.vmem [shape: f32[128,128], index: 3, kind: output, shape index: {}]
  %s4 = sld [smem:[#allocation0]]
  $region26: #{layerwise_autoencoder_forward.1} parent=0
    _
  %s6 = ssub.s32 1, %s4
  %s7 = scalar_select 0, %s6, %s4
  $region1: #{layerwise_autoencoder_forward.1} parent=0
    #allocation2 [shape = 'u8[196608]{0}', space=vmem, size = 0x30000, scoped, tag = 'input window, operand 1, single buffered']
    #allocation3 [shape = 's32[1]{0}', space=sflag, size = 0x4, scoped, tag = 'scoped memory for layerwise_autoencoder_forward.1']
    %8 = vsyncpa [#allocation3], 0
    // Predicated region
    $region2: #{layerwise_autoencoder_forward.1} parent=1 // pred_check
      _
    $region3: #{layerwise_autoencoder_forward.1} parent=1 // pred_check_branch
      %10 = sbr.rel (0) target = $region5
    $region4: #{layerwise_autoencoder_forward.1} parent=1 // pred_region
      _
    $region5: #{layerwise_autoencoder_forward.1} parent=1 // pred_fallthru
      _
    // Predicated region
    $region6: #{layerwise_autoencoder_forward.1} parent=1 // pred_check
      _
    $region7: #{layerwise_autoencoder_forward.1} parent=1 // pred_check_branch
      %12 = sbr.rel (0) target = $region9
    $region8: #{layerwise_autoencoder_forward.1} parent=1 // pred_region
      %s14 = ssub.s32 6144, 6144
      %15 = vsyncadd [#allocation3], %s14
      %s16 = sshll.u32 [#allocation2], 4
      %s17 = int_to_ptr.vmem [resolvable:$true] %s16
      %22 = dma.hbm_to_vmem [thread:$0]  %s1, 6144, %s17, [#allocation3], 64, 64, 4
    $region9: #{layerwise_autoencoder_forward.1} parent=1 // pred_fallthru
      _
    // Predicated region
    $region10: #{layerwise_autoencoder_forward.1} parent=1 // pred_check
      _
    $region11: #{layerwise_autoencoder_forward.1} parent=1 // pred_check_branch
      %24 = sbr.rel (0) target = $region13
    $region12: #{layerwise_autoencoder_forward.1} parent=1 // pred_region
      _
    $region13: #{layerwise_autoencoder_forward.1} parent=1 // pred_fallthru
      _
    // Predicated region
    $region14: #{layerwise_autoencoder_forward.1} parent=1 // pred_check
      _
    $region15: #{layerwise_autoencoder_forward.1} parent=1 // pred_check_branch
      %26 = sbr.rel (0) target = $region17
    $region16: #{layerwise_autoencoder_forward.1} parent=1 // pred_region
      %27 = dma.done [#allocation3], 6144
    $region17: #{layerwise_autoencoder_forward.1} parent=1 // pred_fallthru
      _
    %v29 = vld [vmem:[%s0] sm:$0xf]
    %v30 = vld [vmem:[%s0 + $0x4] sm:$0xf]
    %v31 = vld [vmem:[%s0 + $0x8] sm:$0xf]
    %v32 = vld [vmem:[%s0 + $0xc] sm:$0xf]
    %v33 = vld [vmem:[%s0 + $0x10] sm:$0xf]
    %v34 = vld [vmem:[%s0 + $0x14] sm:$0xf]
    %v35 = vld [vmem:[%s0 + $0x18] sm:$0xf]
    %v36 = vld [vmem:[%s0 + $0x1c] sm:$0xf]
    %v37 = vld [vmem:[%s0 + $0x20] sm:$0xf]
    %v38 = vld [vmem:[%s0 + $0x24] sm:$0xf]
    %v39 = vld [vmem:[%s0 + $0x28] sm:$0xf]
    %v40 = vld [vmem:[%s0 + $0x2c] sm:$0xf]
    %v41 = vld [vmem:[%s0 + $0x30] sm:$0xf]
    %v42 = vld [vmem:[%s0 + $0x34] sm:$0xf]
    %v43 = vld [vmem:[%s0 + $0x38] sm:$0xf]
    %v44 = vld [vmem:[%s0 + $0x3c] sm:$0xf]
    %v45 = vld [vmem:[#allocation2] sm:$0xf]
    %v46 = vld [vmem:[#allocation2 + $0x4] sm:$0xf]
    %v47 = vld [vmem:[#allocation2 + $0x8] sm:$0xf]
    %v48 = vld [vmem:[#allocation2 + $0xc] sm:$0xf]
    %v49 = vld [vmem:[#allocation2 + $0x10] sm:$0xf]
    %v50 = vld [vmem:[#allocation2 + $0x14] sm:$0xf]
    %v51 = vld [vmem:[#allocation2 + $0x18] sm:$0xf]
    %v52 = vld [vmem:[#allocation2 + $0x1c] sm:$0xf]
    %v53 = vld [vmem:[#allocation2 + $0x20] sm:$0xf]
    %v54 = vld [vmem:[#allocation2 + $0x24] sm:$0xf]
    %v55 = vld [vmem:[#allocation2 + $0x28] sm:$0xf]
    %v56 = vld [vmem:[#allocation2 + $0x2c] sm:$0xf]
    %v57 = vld [vmem:[#allocation2 + $0x30] sm:$0xf]
    %v58 = vld [vmem:[#allocation2 + $0x34] sm:$0xf]
    %v59 = vld [vmem:[#allocation2 + $0x38] sm:$0xf]
    %v60 = vld [vmem:[#allocation2 + $0x3c] sm:$0xf]
    %v61 = vld [vmem:[%s2] sm:$0x1]
    %v63 = vlaneseq
    %v64 = vshrl.u32 %v63, 7
    %v65 = vsub.s32 0, %v64
    %v66 = vrot.slane %v61, %v65
    %v84 = vunpack.c.l.b16 %v29
    %v85 = vunpack.c.l.b16 %v30
    %v86 = vunpack.c.l.b16 %v31
    %v87 = vunpack.c.l.b16 %v32
    %v88 = vunpack.c.l.b16 %v33
    %v89 = vunpack.c.l.b16 %v34
    %v90 = vunpack.c.l.b16 %v35
    %v91 = vunpack.c.l.b16 %v36
    %v92 = vunpack.c.l.b16 %v37
    %v93 = vunpack.c.l.b16 %v38
    %v94 = vunpack.c.l.b16 %v39
    %v95 = vunpack.c.l.b16 %v40
    %v96 = vunpack.c.l.b16 %v41
    %v97 = vunpack.c.l.b16 %v42
    %v98 = vunpack.c.l.b16 %v43
    %v99 = vunpack.c.l.b16 %v44
    %v100 = vpack.c.b16 %v85, %v84
    %v101 = vpack.c.b16 %v87, %v86
    %v102 = vpack.c.b16 %v89, %v88
    %v103 = vpack.c.b16 %v91, %v90
    %v104 = vpack.c.b16 %v93, %v92
    %v105 = vpack.c.b16 %v95, %v94
    %v106 = vpack.c.b16 %v97, %v96
    %v107 = vpack.c.b16 %v99, %v98
    %v132 = vunpack.c.l.b16 %v45
    %v133 = vunpack.c.l.b16 %v46
    %v134 = vunpack.c.l.b16 %v47
    %v135 = vunpack.c.l.b16 %v48
    %v136 = vunpack.c.l.b16 %v49
    %v137 = vunpack.c.l.b16 %v50
    %v138 = vunpack.c.l.b16 %v51
    %v139 = vunpack.c.l.b16 %v52
    %v140 = vunpack.c.l.b16 %v53
    %v141 = vunpack.c.l.b16 %v54
    %v142 = vunpack.c.l.b16 %v55
    %v143 = vunpack.c.l.b16 %v56
    %v144 = vunpack.c.l.b16 %v57
    %v145 = vunpack.c.l.b16 %v58
    %v146 = vunpack.c.l.b16 %v59
    %v147 = vunpack.c.l.b16 %v60
    %v148 = vpack.c.b16 %v133, %v132
    %v149 = vpack.c.b16 %v135, %v134
    %v150 = vpack.c.b16 %v137, %v136
    %v151 = vpack.c.b16 %v139, %v138
    %v152 = vpack.c.b16 %v141, %v140
    %v153 = vpack.c.b16 %v143, %v142
    %v154 = vpack.c.b16 %v145, %v144
    %v155 = vpack.c.b16 %v147, %v146
    %164 = vmatprep.subr.bf16.mxu0 0
    %165 = vmatpush1.bf16.msra.mxu0 %v148
    %166 = vmatprep.subr.bf16.mxu0 0
    %167 = vmatpush1.bf16.msra.mxu0 %v149
    %168 = vmatprep.subr.bf16.mxu0 0
    %169 = vmatpush1.bf16.msra.mxu0 %v150
    %170 = vmatprep.subr.bf16.mxu0 0
    %171 = vmatpush1.bf16.msra.mxu0 %v151
    %172 = vmatprep.subr.bf16.mxu0 0
    %173 = vmatpush1.bf16.msra.mxu0 %v152
    %174 = vmatprep.subr.bf16.mxu0 0
    %175 = vmatpush1.bf16.msra.mxu0 %v153
    %176 = vmatprep.subr.bf16.mxu0 0
    %177 = vmatpush1.bf16.msra.mxu0 %v154
    %178 = vmatprep.subr.bf16.mxu0 0
    %179 = vmatpush1.bf16.msra.mxu0 %v155
    %180 = vmatprep.subr.bf16.mxu0 0
    %181 = vmatpush1.bf16.msra.mxu0 0
    %182 = vmatprep.subr.bf16.mxu0 0
    %183 = vmatpush1.bf16.msra.mxu0 0
    %184 = vmatprep.subr.bf16.mxu0 0
    %185 = vmatpush1.bf16.msra.mxu0 0
    %186 = vmatprep.subr.bf16.mxu0 0
    %187 = vmatpush1.bf16.msra.mxu0 0
    %188 = vmatprep.subr.bf16.mxu0 0
    %189 = vmatpush1.bf16.msra.mxu0 0
    %190 = vmatprep.subr.bf16.mxu0 0
    %191 = vmatpush1.bf16.msra.mxu0 0
    %192 = vmatprep.subr.bf16.mxu0 0
    %193 = vmatpush1.bf16.msra.mxu0 0
    %194 = vmatprep.subr.bf16.mxu0 0
    %195 = vmatpush1.bf16.msra.mxu0 0
    %196 = vmatprep.mubr.bf16.mxu0 0
    %197 = vmatmul.mubr.bf16.gmra.mrb[0].mxu0 %v100
    %v198 = vpop.f32.mrb[0].mxu0
    %v199 = vadd.f32 %v66, %v198
    %v200 = vpop.f32.mrb[0].mxu0
    %v201 = vpop.f32.mrb[0].mxu0
    %v202 = vadd.f32 %v66, %v201
    %v203 = vpop.f32.mrb[0].mxu0
    %204 = vmatprep.mubr.bf16.mxu0 0
    %205 = vmatmul.mubr.bf16.gmra.mrb[0].mxu0 %v101
    %v206 = vpop.f32.mrb[0].mxu0
    %v207 = vadd.f32 %v66, %v206
    %v208 = vpop.f32.mrb[0].mxu0
    %v209 = vpop.f32.mrb[0].mxu0
    %v210 = vadd.f32 %v66, %v209
    %v211 = vpop.f32.mrb[0].mxu0
    %212 = vmatprep.mubr.bf16.mxu0 0
    %213 = vmatmul.mubr.bf16.gmra.mrb[0].mxu0 %v102
    %v214 = vpop.f32.mrb[0].mxu0
    %v215 = vadd.f32 %v66, %v214
    %v216 = vpop.f32.mrb[0].mxu0
    %v217 = vpop.f32.mrb[0].mxu0
    %v218 = vadd.f32 %v66, %v217
    %v219 = vpop.f32.mrb[0].mxu0
    %220 = vmatprep.mubr.bf16.mxu0 0
    %221 = vmatmul.mubr.bf16.gmra.mrb[0].mxu0 %v103
    %v222 = vpop.f32.mrb[0].mxu0
    %v223 = vadd.f32 %v66, %v222
    %v224 = vpop.f32.mrb[0].mxu0
    %v225 = vpop.f32.mrb[0].mxu0
    %v226 = vadd.f32 %v66, %v225
    %v227 = vpop.f32.mrb[0].mxu0
    %228 = vmatprep.mubr.bf16.mxu0 0
    %229 = vmatmul.mubr.bf16.gmra.mrb[0].mxu0 %v104
    %v230 = vpop.f32.mrb[0].mxu0
    %v231 = vadd.f32 %v66, %v230
    %v232 = vpop.f32.mrb[0].mxu0
    %v233 = vpop.f32.mrb[0].mxu0
    %v234 = vadd.f32 %v66, %v233
    %v235 = vpop.f32.mrb[0].mxu0
    %236 = vmatprep.mubr.bf16.mxu0 0
    %237 = vmatmul.mubr.bf16.gmra.mrb[0].mxu0 %v105
    %v238 = vpop.f32.mrb[0].mxu0
    %v239 = vadd.f32 %v66, %v238
    %v240 = vpop.f32.mrb[0].mxu0
    %v241 = vpop.f32.mrb[0].mxu0
    %v242 = vadd.f32 %v66, %v241
    %v243 = vpop.f32.mrb[0].mxu0
    %244 = vmatprep.mubr.bf16.mxu0 0
    %245 = vmatmul.mubr.bf16.gmra.mrb[0].mxu0 %v106
    %v246 = vpop.f32.mrb[0].mxu0
    %v247 = vadd.f32 %v66, %v246
    %v248 = vpop.f32.mrb[0].mxu0
    %v249 = vpop.f32.mrb[0].mxu0
    %v250 = vadd.f32 %v66, %v249
    %v251 = vpop.f32.mrb[0].mxu0
    %252 = vmatprep.mubr.bf16.mxu0 0
    %253 = vmatmul.mubr.bf16.gmra.mrb[0].mxu0 %v107
    %v254 = vpop.f32.mrb[0].mxu0
    %v255 = vadd.f32 %v66, %v254
    %v256 = vpop.f32.mrb[0].mxu0
    %v257 = vpop.f32.mrb[0].mxu0
    %v258 = vadd.f32 %v66, %v257
    %v259 = vpop.f32.mrb[0].mxu0
    %260 = vdwg.mxu0
    %v261 = vmax.f32 %v199, 0.0
    %v262 = vmax.f32 %v202, 0.0
    %v263 = vmax.f32 %v207, 0.0
    %v264 = vmax.f32 %v210, 0.0
    %v265 = vmax.f32 %v215, 0.0
    %v266 = vmax.f32 %v218, 0.0
    %v267 = vmax.f32 %v223, 0.0
    %v268 = vmax.f32 %v226, 0.0
    %v269 = vmax.f32 %v231, 0.0
    %v270 = vmax.f32 %v234, 0.0
    %v271 = vmax.f32 %v239, 0.0
    %v272 = vmax.f32 %v242, 0.0
    %v273 = vmax.f32 %v247, 0.0
    %v274 = vmax.f32 %v250, 0.0
    %v275 = vmax.f32 %v255, 0.0
    %v276 = vmax.f32 %v258, 0.0
    %v277 = vpack.c.bf16 %v262, %v261
    %v278 = vpack.c.bf16 %v264, %v263
    %v279 = vpack.c.bf16 %v266, %v265
    %v280 = vpack.c.bf16 %v268, %v267
    %v281 = vpack.c.bf16 %v270, %v269
    %v282 = vpack.c.bf16 %v272, %v271
    %v283 = vpack.c.bf16 %v274, %v273
    %v284 = vpack.c.bf16 %v276, %v275
    %s285 = scalar_lea.vmem [#allocation2], 64
    %v286 = vld [vmem:[%s285] sm:$0xf]
    %v287 = vld [vmem:[%s285 + $0x4] sm:$0xf]
    %v288 = vld [vmem:[%s285 + $0x8] sm:$0xf]
    %v289 = vld [vmem:[%s285 + $0xc] sm:$0xf]
    %v290 = vld [vmem:[%s285 + $0x10] sm:$0xf]
    %v291 = vld [vmem:[%s285 + $0x14] sm:$0xf]
    %v292 = vld [vmem:[%s285 + $0x18] sm:$0xf]
    %v293 = vld [vmem:[%s285 + $0x1c] sm:$0xf]
    %v294 = vld [vmem:[%s285 + $0x20] sm:$0xf]
    %v295 = vld [vmem:[%s285 + $0x24] sm:$0xf]
    %v296 = vld [vmem:[%s285 + $0x28] sm:$0xf]
    %v297 = vld [vmem:[%s285 + $0x2c] sm:$0xf]
    %v298 = vld [vmem:[%s285 + $0x30] sm:$0xf]
    %v299 = vld [vmem:[%s285 + $0x34] sm:$0xf]
    %v300 = vld [vmem:[%s285 + $0x38] sm:$0xf]
    %v301 = vld [vmem:[%s285 + $0x3c] sm:$0xf]
    %s302 = scalar_lea.vmem %s2, 1
    %v303 = vld [vmem:[%s302] sm:$0x1]
    %v305 = vlaneseq
    %v306 = vshrl.u32 %v305, 7
    %v307 = vsub.s32 0, %v306
    %v308 = vrot.slane %v303, %v307
    %v326 = vunpack.c.l.b16 %v286
    %v327 = vunpack.c.l.b16 %v287
    %v328 = vunpack.c.l.b16 %v288
    %v329 = vunpack.c.l.b16 %v289
    %v330 = vunpack.c.l.b16 %v290
    %v331 = vunpack.c.l.b16 %v291
    %v332 = vunpack.c.l.b16 %v292
    %v333 = vunpack.c.l.b16 %v293
    %v334 = vunpack.c.l.b16 %v294
    %v335 = vunpack.c.l.b16 %v295
    %v336 = vunpack.c.l.b16 %v296
    %v337 = vunpack.c.l.b16 %v297
    %v338 = vunpack.c.l.b16 %v298
    %v339 = vunpack.c.l.b16 %v299
    %v340 = vunpack.c.l.b16 %v300
    %v341 = vunpack.c.l.b16 %v301
    %v342 = vpack.c.b16 %v327, %v326
    %v343 = vpack.c.b16 %v329, %v328
    %v344 = vpack.c.b16 %v331, %v330
    %v345 = vpack.c.b16 %v333, %v332
    %v346 = vpack.c.b16 %v335, %v334
    %v347 = vpack.c.b16 %v337, %v336
    %v348 = vpack.c.b16 %v339, %v338
    %v349 = vpack.c.b16 %v341, %v340
    %358 = vmatprep.subr.bf16.mxu0 0
    %359 = vmatpush1.bf16.msra.mxu0 %v342
    %360 = vmatprep.subr.bf16.mxu0 0
    %361 = vmatpush1.bf16.msra.mxu0 %v343
    %362 = vmatprep.subr.bf16.mxu0 0
    %363 = vmatpush1.bf16.msra.mxu0 %v344
    %364 = vmatprep.subr.bf16.mxu0 0
    %365 = vmatpush1.bf16.msra.mxu0 %v345
    %366 = vmatprep.subr.bf16.mxu0 0
    %367 = vmatpush1.bf16.msra.mxu0 %v346
    %368 = vmatprep.subr.bf16.mxu0 0
    %369 = vmatpush1.bf16.msra.mxu0 %v347
    %370 = vmatprep.subr.bf16.mxu0 0
    %371 = vmatpush1.bf16.msra.mxu0 %v348
    %372 = vmatprep.subr.bf16.mxu0 0
    %373 = vmatpush1.bf16.msra.mxu0 %v349
    %374 = vmatprep.subr.bf16.mxu0 0
    %375 = vmatpush1.bf16.msra.mxu0 0
    %376 = vmatprep.subr.bf16.mxu0 0
    %377 = vmatpush1.bf16.msra.mxu0 0
    %378 = vmatprep.subr.bf16.mxu0 0
    %379 = vmatpush1.bf16.msra.mxu0 0
    %380 = vmatprep.subr.bf16.mxu0 0
    %381 = vmatpush1.bf16.msra.mxu0 0
    %382 = vmatprep.subr.bf16.mxu0 0
    %383 = vmatpush1.bf16.msra.mxu0 0
    %384 = vmatprep.subr.bf16.mxu0 0
    %385 = vmatpush1.bf16.msra.mxu0 0
    %386 = vmatprep.subr.bf16.mxu0 0
    %387 = vmatpush1.bf16.msra.mxu0 0
    %388 = vmatprep.subr.bf16.mxu0 0
    %389 = vmatpush1.bf16.msra.mxu0 0
    %390 = vmatprep.mubr.bf16.mxu0 0
    %391 = vmatmul.mubr.bf16.gmra.mrb[0].mxu0 %v277
    %v392 = vpop.f32.mrb[0].mxu0
    %v393 = vadd.f32 %v308, %v392
    %v394 = vpop.f32.mrb[0].mxu0
    %v395 = vpop.f32.mrb[0].mxu0
    %v396 = vadd.f32 %v308, %v395
    %v397 = vpop.f32.mrb[0].mxu0
    %398 = vmatprep.mubr.bf16.mxu0 0
    %399 = vmatmul.mubr.bf16.gmra.mrb[0].mxu0 %v278
    %v400 = vpop.f32.mrb[0].mxu0
    %v401 = vadd.f32 %v308, %v400
    %v402 = vpop.f32.mrb[0].mxu0
    %v403 = vpop.f32.mrb[0].mxu0
    %v404 = vadd.f32 %v308, %v403
    %v405 = vpop.f32.mrb[0].mxu0
    %406 = vmatprep.mubr.bf16.mxu0 0
    %407 = vmatmul.mubr.bf16.gmra.mrb[0].mxu0 %v279
    %v408 = vpop.f32.mrb[0].mxu0
    %v409 = vadd.f32 %v308, %v408
    %v410 = vpop.f32.mrb[0].mxu0
    %v411 = vpop.f32.mrb[0].mxu0
    %v412 = vadd.f32 %v308, %v411
    %v413 = vpop.f32.mrb[0].mxu0
    %414 = vmatprep.mubr.bf16.mxu0 0
    %415 = vmatmul.mubr.bf16.gmra.mrb[0].mxu0 %v280
    %v416 = vpop.f32.mrb[0].mxu0
    %v417 = vadd.f32 %v308, %v416
    %v418 = vpop.f32.mrb[0].mxu0
    %v419 = vpop.f32.mrb[0].mxu0
    %v420 = vadd.f32 %v308, %v419
    %v421 = vpop.f32.mrb[0].mxu0
    %422 = vmatprep.mubr.bf16.mxu0 0
    %423 = vmatmul.mubr.bf16.gmra.mrb[0].mxu0 %v281
    %v424 = vpop.f32.mrb[0].mxu0
    %v425 = vadd.f32 %v308, %v424
    %v426 = vpop.f32.mrb[0].mxu0
    %v427 = vpop.f32.mrb[0].mxu0
    %v428 = vadd.f32 %v308, %v427
    %v429 = vpop.f32.mrb[0].mxu0
    %430 = vmatprep.mubr.bf16.mxu0 0
    %431 = vmatmul.mubr.bf16.gmra.mrb[0].mxu0 %v282
    %v432 = vpop.f32.mrb[0].mxu0
    %v433 = vadd.f32 %v308, %v432
    %v434 = vpop.f32.mrb[0].mxu0
    %v435 = vpop.f32.mrb[0].mxu0
    %v436 = vadd.f32 %v308, %v435
    %v437 = vpop.f32.mrb[0].mxu0
    %438 = vmatprep.mubr.bf16.mxu0 0
    %439 = vmatmul.mubr.bf16.gmra.mrb[0].mxu0 %v283
    %v440 = vpop.f32.mrb[0].mxu0
    %v441 = vadd.f32 %v308, %v440
    %v442 = vpop.f32.mrb[0].mxu0
    %v443 = vpop.f32.mrb[0].mxu0
    %v444 = vadd.f32 %v308, %v443
    %v445 = vpop.f32.mrb[0].mxu0
    %446 = vmatprep.mubr.bf16.mxu0 0
    %447 = vmatmul.mubr.bf16.gmra.mrb[0].mxu0 %v284
    %v448 = vpop.f32.mrb[0].mxu0
    %v449 = vadd.f32 %v308, %v448
    %v450 = vpop.f32.mrb[0].mxu0
    %v451 = vpop.f32.mrb[0].mxu0
    %v452 = vadd.f32 %v308, %v451
    %v453 = vpop.f32.mrb[0].mxu0
    %454 = vdwg.mxu0
    %v455 = vmax.f32 %v393, 0.0
    %v456 = vmax.f32 %v396, 0.0
    %v457 = vmax.f32 %v401, 0.0
    %v458 = vmax.f32 %v404, 0.0
    %v459 = vmax.f32 %v409, 0.0
    %v460 = vmax.f32 %v412, 0.0
    %v461 = vmax.f32 %v417, 0.0
    %v462 = vmax.f32 %v420, 0.0
    %v463 = vmax.f32 %v425, 0.0
    %v464 = vmax.f32 %v428, 0.0
    %v465 = vmax.f32 %v433, 0.0
    %v466 = vmax.f32 %v436, 0.0
    %v467 = vmax.f32 %v441, 0.0
    %v468 = vmax.f32 %v444, 0.0
    %v469 = vmax.f32 %v449, 0.0
    %v470 = vmax.f32 %v452, 0.0
    %v471 = vpack.c.bf16 %v456, %v455
    %v472 = vpack.c.bf16 %v458, %v457
    %v473 = vpack.c.bf16 %v460, %v459
    %v474 = vpack.c.bf16 %v462, %v461
    %v475 = vpack.c.bf16 %v464, %v463
    %v476 = vpack.c.bf16 %v466, %v465
    %v477 = vpack.c.bf16 %v468, %v467
    %v478 = vpack.c.bf16 %v470, %v469
    %s479 = scalar_lea.vmem [#allocation2], 128
    %v480 = vld [vmem:[%s479] sm:$0xf]
    %v481 = vld [vmem:[%s479 + $0x4] sm:$0xf]
    %v482 = vld [vmem:[%s479 + $0x8] sm:$0xf]
    %v483 = vld [vmem:[%s479 + $0xc] sm:$0xf]
    %v484 = vld [vmem:[%s479 + $0x10] sm:$0xf]
    %v485 = vld [vmem:[%s479 + $0x14] sm:$0xf]
    %v486 = vld [vmem:[%s479 + $0x18] sm:$0xf]
    %v487 = vld [vmem:[%s479 + $0x1c] sm:$0xf]
    %v488 = vld [vmem:[%s479 + $0x20] sm:$0xf]
    %v489 = vld [vmem:[%s479 + $0x24] sm:$0xf]
    %v490 = vld [vmem:[%s479 + $0x28] sm:$0xf]
    %v491 = vld [vmem:[%s479 + $0x2c] sm:$0xf]
    %v492 = vld [vmem:[%s479 + $0x30] sm:$0xf]
    %v493 = vld [vmem:[%s479 + $0x34] sm:$0xf]
    %v494 = vld [vmem:[%s479 + $0x38] sm:$0xf]
    %v495 = vld [vmem:[%s479 + $0x3c] sm:$0xf]
    %s496 = scalar_lea.vmem %s2, 2
    %v497 = vld [vmem:[%s496] sm:$0x1]
    %v499 = vlaneseq
    %v500 = vshrl.u32 %v499, 7
    %v501 = vsub.s32 0, %v500
    %v502 = vrot.slane %v497, %v501
    %v520 = vunpack.c.l.b16 %v480
    %v521 = vunpack.c.l.b16 %v481
    %v522 = vunpack.c.l.b16 %v482
    %v523 = vunpack.c.l.b16 %v483
    %v524 = vunpack.c.l.b16 %v484
    %v525 = vunpack.c.l.b16 %v485
    %v526 = vunpack.c.l.b16 %v486
    %v527 = vunpack.c.l.b16 %v487
    %v528 = vunpack.c.l.b16 %v488
    %v529 = vunpack.c.l.b16 %v489
    %v530 = vunpack.c.l.b16 %v490
    %v531 = vunpack.c.l.b16 %v491
    %v532 = vunpack.c.l.b16 %v492
    %v533 = vunpack.c.l.b16 %v493
    %v534 = vunpack.c.l.b16 %v494
    %v535 = vunpack.c.l.b16 %v495
    %v536 = vpack.c.b16 %v521, %v520
    %v537 = vpack.c.b16 %v523, %v522
    %v538 = vpack.c.b16 %v525, %v524
    %v539 = vpack.c.b16 %v527, %v526
    %v540 = vpack.c.b16 %v529, %v528
    %v541 = vpack.c.b16 %v531, %v530
    %v542 = vpack.c.b16 %v533, %v532
    %v543 = vpack.c.b16 %v535, %v534
    %552 = vmatprep.subr.bf16.mxu0 0
    %553 = vmatpush1.bf16.msra.mxu0 %v536
    %554 = vmatprep.subr.bf16.mxu0 0
    %555 = vmatpush1.bf16.msra.mxu0 %v537
    %556 = vmatprep.subr.bf16.mxu0 0
    %557 = vmatpush1.bf16.msra.mxu0 %v538
    %558 = vmatprep.subr.bf16.mxu0 0
    %559 = vmatpush1.bf16.msra.mxu0 %v539
    %560 = vmatprep.subr.bf16.mxu0 0
    %561 = vmatpush1.bf16.msra.mxu0 %v540
    %562 = vmatprep.subr.bf16.mxu0 0
    %563 = vmatpush1.bf16.msra.mxu0 %v541
    %564 = vmatprep.subr.bf16.mxu0 0
    %565 = vmatpush1.bf16.msra.mxu0 %v542
    %566 = vmatprep.subr.bf16.mxu0 0
    %567 = vmatpush1.bf16.msra.mxu0 %v543
    %568 = vmatprep.subr.bf16.mxu0 0
    %569 = vmatpush1.bf16.msra.mxu0 0
    %570 = vmatprep.subr.bf16.mxu0 0
    %571 = vmatpush1.bf16.msra.mxu0 0
    %572 = vmatprep.subr.bf16.mxu0 0
    %573 = vmatpush1.bf16.msra.mxu0 0
    %574 = vmatprep.subr.bf16.mxu0 0
    %575 = vmatpush1.bf16.msra.mxu0 0
    %576 = vmatprep.subr.bf16.mxu0 0
    %577 = vmatpush1.bf16.msra.mxu0 0
    %578 = vmatprep.subr.bf16.mxu0 0
    %579 = vmatpush1.bf16.msra.mxu0 0
    %580 = vmatprep.subr.bf16.mxu0 0
    %581 = vmatpush1.bf16.msra.mxu0 0
    %582 = vmatprep.subr.bf16.mxu0 0
    %583 = vmatpush1.bf16.msra.mxu0 0
    %584 = vmatprep.mubr.bf16.mxu0 0
    %585 = vmatmul.mubr.bf16.gmra.mrb[0].mxu0 %v471
    %v586 = vpop.f32.mrb[0].mxu0
    %v587 = vadd.f32 %v502, %v586
    %v588 = vpop.f32.mrb[0].mxu0
    %v589 = vpop.f32.mrb[0].mxu0
    %v590 = vadd.f32 %v502, %v589
    %v591 = vpop.f32.mrb[0].mxu0
    %592 = vmatprep.mubr.bf16.mxu0 0
    %593 = vmatmul.mubr.bf16.gmra.mrb[0].mxu0 %v472
    %v594 = vpop.f32.mrb[0].mxu0
    %v595 = vadd.f32 %v502, %v594
    %v596 = vpop.f32.mrb[0].mxu0
    %v597 = vpop.f32.mrb[0].mxu0
    %v598 = vadd.f32 %v502, %v597
    %v599 = vpop.f32.mrb[0].mxu0
    %600 = vmatprep.mubr.bf16.mxu0 0
    %601 = vmatmul.mubr.bf16.gmra.mrb[0].mxu0 %v473
    %v602 = vpop.f32.mrb[0].mxu0
    %v603 = vadd.f32 %v502, %v602
    %v604 = vpop.f32.mrb[0].mxu0
    %v605 = vpop.f32.mrb[0].mxu0
    %v606 = vadd.f32 %v502, %v605
    %v607 = vpop.f32.mrb[0].mxu0
    %608 = vmatprep.mubr.bf16.mxu0 0
    %609 = vmatmul.mubr.bf16.gmra.mrb[0].mxu0 %v474
    %v610 = vpop.f32.mrb[0].mxu0
    %v611 = vadd.f32 %v502, %v610
    %v612 = vpop.f32.mrb[0].mxu0
    %v613 = vpop.f32.mrb[0].mxu0
    %v614 = vadd.f32 %v502, %v613
    %v615 = vpop.f32.mrb[0].mxu0
    %616 = vmatprep.mubr.bf16.mxu0 0
    %617 = vmatmul.mubr.bf16.gmra.mrb[0].mxu0 %v475
    %v618 = vpop.f32.mrb[0].mxu0
    %v619 = vadd.f32 %v502, %v618
    %v620 = vpop.f32.mrb[0].mxu0
    %v621 = vpop.f32.mrb[0].mxu0
    %v622 = vadd.f32 %v502, %v621
    %v623 = vpop.f32.mrb[0].mxu0
    %624 = vmatprep.mubr.bf16.mxu0 0
    %625 = vmatmul.mubr.bf16.gmra.mrb[0].mxu0 %v476
    %v626 = vpop.f32.mrb[0].mxu0
    %v627 = vadd.f32 %v502, %v626
    %v628 = vpop.f32.mrb[0].mxu0
    %v629 = vpop.f32.mrb[0].mxu0
    %v630 = vadd.f32 %v502, %v629
    %v631 = vpop.f32.mrb[0].mxu0
    %632 = vmatprep.mubr.bf16.mxu0 0
    %633 = vmatmul.mubr.bf16.gmra.mrb[0].mxu0 %v477
    %v634 = vpop.f32.mrb[0].mxu0
    %v635 = vadd.f32 %v502, %v634
    %v636 = vpop.f32.mrb[0].mxu0
    %v637 = vpop.f32.mrb[0].mxu0
    %v638 = vadd.f32 %v502, %v637
    %v639 = vpop.f32.mrb[0].mxu0
    %640 = vmatprep.mubr.bf16.mxu0 0
    %641 = vmatmul.mubr.bf16.gmra.mrb[0].mxu0 %v478
    %v642 = vpop.f32.mrb[0].mxu0
    %v643 = vadd.f32 %v502, %v642
    %v644 = vpop.f32.mrb[0].mxu0
    %v645 = vpop.f32.mrb[0].mxu0
    %v646 = vadd.f32 %v502, %v645
    %v647 = vpop.f32.mrb[0].mxu0
    %648 = vdwg.mxu0
    %v649 = vmax.f32 %v587, 0.0
    %v650 = vmax.f32 %v590, 0.0
    %v651 = vmax.f32 %v595, 0.0
    %v652 = vmax.f32 %v598, 0.0
    %v653 = vmax.f32 %v603, 0.0
    %v654 = vmax.f32 %v606, 0.0
    %v655 = vmax.f32 %v611, 0.0
    %v656 = vmax.f32 %v614, 0.0
    %v657 = vmax.f32 %v619, 0.0
    %v658 = vmax.f32 %v622, 0.0
    %v659 = vmax.f32 %v627, 0.0
    %v660 = vmax.f32 %v630, 0.0
    %v661 = vmax.f32 %v635, 0.0
    %v662 = vmax.f32 %v638, 0.0
    %v663 = vmax.f32 %v643, 0.0
    %v664 = vmax.f32 %v646, 0.0
    %v665 = vpack.c.bf16 %v650, %v649
    %v666 = vpack.c.bf16 %v652, %v651
    %v667 = vpack.c.bf16 %v654, %v653
    %v668 = vpack.c.bf16 %v656, %v655
    %v669 = vpack.c.bf16 %v658, %v657
    %v670 = vpack.c.bf16 %v660, %v659
    %v671 = vpack.c.bf16 %v662, %v661
    %v672 = vpack.c.bf16 %v664, %v663
    %s673 = scalar_lea.vmem [#allocation2], 192
    %v674 = vld [vmem:[%s673] sm:$0xf]
    %v675 = vld [vmem:[%s673 + $0x4] sm:$0xf]
    %v676 = vld [vmem:[%s673 + $0x8] sm:$0xf]
    %v677 = vld [vmem:[%s673 + $0xc] sm:$0xf]
    %v678 = vld [vmem:[%s673 + $0x10] sm:$0xf]
    %v679 = vld [vmem:[%s673 + $0x14] sm:$0xf]
    %v680 = vld [vmem:[%s673 + $0x18] sm:$0xf]
    %v681 = vld [vmem:[%s673 + $0x1c] sm:$0xf]
    %v682 = vld [vmem:[%s673 + $0x20] sm:$0xf]
    %v683 = vld [vmem:[%s673 + $0x24] sm:$0xf]
    %v684 = vld [vmem:[%s673 + $0x28] sm:$0xf]
    %v685 = vld [vmem:[%s673 + $0x2c] sm:$0xf]
    %v686 = vld [vmem:[%s673 + $0x30] sm:$0xf]
    %v687 = vld [vmem:[%s673 + $0x34] sm:$0xf]
    %v688 = vld [vmem:[%s673 + $0x38] sm:$0xf]
    %v689 = vld [vmem:[%s673 + $0x3c] sm:$0xf]
    %s690 = scalar_lea.vmem %s2, 3
    %v691 = vld [vmem:[%s690] sm:$0x1]
    %v693 = vlaneseq
    %v694 = vshrl.u32 %v693, 7
    %v695 = vsub.s32 0, %v694
    %v696 = vrot.slane %v691, %v695
    %v714 = vunpack.c.l.b16 %v674
    %v715 = vunpack.c.l.b16 %v675
    %v716 = vunpack.c.l.b16 %v676
    %v717 = vunpack.c.l.b16 %v677
    %v718 = vunpack.c.l.b16 %v678
    %v719 = vunpack.c.l.b16 %v679
    %v720 = vunpack.c.l.b16 %v680
    %v721 = vunpack.c.l.b16 %v681
    %v722 = vunpack.c.l.b16 %v682
    %v723 = vunpack.c.l.b16 %v683
    %v724 = vunpack.c.l.b16 %v684
    %v725 = vunpack.c.l.b16 %v685
    %v726 = vunpack.c.l.b16 %v686
    %v727 = vunpack.c.l.b16 %v687
    %v728 = vunpack.c.l.b16 %v688
    %v729 = vunpack.c.l.b16 %v689
    %v730 = vpack.c.b16 %v715, %v714
    %v731 = vpack.c.b16 %v717, %v716
    %v732 = vpack.c.b16 %v719, %v718
    %v733 = vpack.c.b16 %v721, %v720
    %v734 = vpack.c.b16 %v723, %v722
    %v735 = vpack.c.b16 %v725, %v724
    %v736 = vpack.c.b16 %v727, %v726
    %v737 = vpack.c.b16 %v729, %v728
    %746 = vmatprep.subr.bf16.mxu0 0
    %747 = vmatpush1.bf16.msra.mxu0 %v730
    %748 = vmatprep.subr.bf16.mxu0 0
    %749 = vmatpush1.bf16.msra.mxu0 %v731
    %750 = vmatprep.subr.bf16.mxu0 0
    %751 = vmatpush1.bf16.msra.mxu0 %v732
    %752 = vmatprep.subr.bf16.mxu0 0
    %753 = vmatpush1.bf16.msra.mxu0 %v733
    %754 = vmatprep.subr.bf16.mxu0 0
    %755 = vmatpush1.bf16.msra.mxu0 %v734
    %756 = vmatprep.subr.bf16.mxu0 0
    %757 = vmatpush1.bf16.msra.mxu0 %v735
    %758 = vmatprep.subr.bf16.mxu0 0
    %759 = vmatpush1.bf16.msra.mxu0 %v736
    %760 = vmatprep.subr.bf16.mxu0 0
    %761 = vmatpush1.bf16.msra.mxu0 %v737
    %762 = vmatprep.subr.bf16.mxu0 0
    %763 = vmatpush1.bf16.msra.mxu0 0
    %764 = vmatprep.subr.bf16.mxu0 0
    %765 = vmatpush1.bf16.msra.mxu0 0
    %766 = vmatprep.subr.bf16.mxu0 0
    %767 = vmatpush1.bf16.msra.mxu0 0
    %768 = vmatprep.subr.bf16.mxu0 0
    %769 = vmatpush1.bf16.msra.mxu0 0
    %770 = vmatprep.subr.bf16.mxu0 0
    %771 = vmatpush1.bf16.msra.mxu0 0
    %772 = vmatprep.subr.bf16.mxu0 0
    %773 = vmatpush1.bf16.msra.mxu0 0
    %774 = vmatprep.subr.bf16.mxu0 0
    %775 = vmatpush1.bf16.msra.mxu0 0
    %776 = vmatprep.subr.bf16.mxu0 0
    %777 = vmatpush1.bf16.msra.mxu0 0
    %778 = vmatprep.mubr.bf16.mxu0 0
    %779 = vmatmul.mubr.bf16.gmra.mrb[0].mxu0 %v665
    %v780 = vpop.f32.mrb[0].mxu0
    %v781 = vadd.f32 %v696, %v780
    %v782 = vpop.f32.mrb[0].mxu0
    %v783 = vpop.f32.mrb[0].mxu0
    %v784 = vadd.f32 %v696, %v783
    %v785 = vpop.f32.mrb[0].mxu0
    %786 = vmatprep.mubr.bf16.mxu0 0
    %787 = vmatmul.mubr.bf16.gmra.mrb[0].mxu0 %v666
    %v788 = vpop.f32.mrb[0].mxu0
    %v789 = vadd.f32 %v696, %v788
    %v790 = vpop.f32.mrb[0].mxu0
    %v791 = vpop.f32.mrb[0].mxu0
    %v792 = vadd.f32 %v696, %v791
    %v793 = vpop.f32.mrb[0].mxu0
    %794 = vmatprep.mubr.bf16.mxu0 0
    %795 = vmatmul.mubr.bf16.gmra.mrb[0].mxu0 %v667
    %v796 = vpop.f32.mrb[0].mxu0
    %v797 = vadd.f32 %v696, %v796
    %v798 = vpop.f32.mrb[0].mxu0
    %v799 = vpop.f32.mrb[0].mxu0
    %v800 = vadd.f32 %v696, %v799
    %v801 = vpop.f32.mrb[0].mxu0
    %802 = vmatprep.mubr.bf16.mxu0 0
    %803 = vmatmul.mubr.bf16.gmra.mrb[0].mxu0 %v668
    %v804 = vpop.f32.mrb[0].mxu0
    %v805 = vadd.f32 %v696, %v804
    %v806 = vpop.f32.mrb[0].mxu0
    %v807 = vpop.f32.mrb[0].mxu0
    %v808 = vadd.f32 %v696, %v807
    %v809 = vpop.f32.mrb[0].mxu0
    %810 = vmatprep.mubr.bf16.mxu0 0
    %811 = vmatmul.mubr.bf16.gmra.mrb[0].mxu0 %v669
    %v812 = vpop.f32.mrb[0].mxu0
    %v813 = vadd.f32 %v696, %v812
    %v814 = vpop.f32.mrb[0].mxu0
    %v815 = vpop.f32.mrb[0].mxu0
    %v816 = vadd.f32 %v696, %v815
    %v817 = vpop.f32.mrb[0].mxu0
    %818 = vmatprep.mubr.bf16.mxu0 0
    %819 = vmatmul.mubr.bf16.gmra.mrb[0].mxu0 %v670
    %v820 = vpop.f32.mrb[0].mxu0
    %v821 = vadd.f32 %v696, %v820
    %v822 = vpop.f32.mrb[0].mxu0
    %v823 = vpop.f32.mrb[0].mxu0
    %v824 = vadd.f32 %v696, %v823
    %v825 = vpop.f32.mrb[0].mxu0
    %826 = vmatprep.mubr.bf16.mxu0 0
    %827 = vmatmul.mubr.bf16.gmra.mrb[0].mxu0 %v671
    %v828 = vpop.f32.mrb[0].mxu0
    %v829 = vadd.f32 %v696, %v828
    %v830 = vpop.f32.mrb[0].mxu0
    %v831 = vpop.f32.mrb[0].mxu0
    %v832 = vadd.f32 %v696, %v831
    %v833 = vpop.f32.mrb[0].mxu0
    %834 = vmatprep.mubr.bf16.mxu0 0
    %835 = vmatmul.mubr.bf16.gmra.mrb[0].mxu0 %v672
    %v836 = vpop.f32.mrb[0].mxu0
    %v837 = vadd.f32 %v696, %v836
    %v838 = vpop.f32.mrb[0].mxu0
    %v839 = vpop.f32.mrb[0].mxu0
    %v840 = vadd.f32 %v696, %v839
    %v841 = vpop.f32.mrb[0].mxu0
    %842 = vdwg.mxu0
    %v843 = vmax.f32 %v781, 0.0
    %v844 = vmax.f32 %v784, 0.0
    %v845 = vmax.f32 %v789, 0.0
    %v846 = vmax.f32 %v792, 0.0
    %v847 = vmax.f32 %v797, 0.0
    %v848 = vmax.f32 %v800, 0.0
    %v849 = vmax.f32 %v805, 0.0
    %v850 = vmax.f32 %v808, 0.0
    %v851 = vmax.f32 %v813, 0.0
    %v852 = vmax.f32 %v816, 0.0
    %v853 = vmax.f32 %v821, 0.0
    %v854 = vmax.f32 %v824, 0.0
    %v855 = vmax.f32 %v829, 0.0
    %v856 = vmax.f32 %v832, 0.0
    %v857 = vmax.f32 %v837, 0.0
    %v858 = vmax.f32 %v840, 0.0
    %v859 = vpack.c.bf16 %v844, %v843
    %v860 = vpack.c.bf16 %v846, %v845
    %v861 = vpack.c.bf16 %v848, %v847
    %v862 = vpack.c.bf16 %v850, %v849
    %v863 = vpack.c.bf16 %v852, %v851
    %v864 = vpack.c.bf16 %v854, %v853
    %v865 = vpack.c.bf16 %v856, %v855
    %v866 = vpack.c.bf16 %v858, %v857
    %s867 = scalar_lea.vmem [#allocation2], 256
    %v868 = vld [vmem:[%s867] sm:$0xf]
    %v869 = vld [vmem:[%s867 + $0x4] sm:$0xf]
    %v870 = vld [vmem:[%s867 + $0x8] sm:$0xf]
    %v871 = vld [vmem:[%s867 + $0xc] sm:$0xf]
    %v872 = vld [vmem:[%s867 + $0x10] sm:$0xf]
    %v873 = vld [vmem:[%s867 + $0x14] sm:$0xf]
    %v874 = vld [vmem:[%s867 + $0x18] sm:$0xf]
    %v875 = vld [vmem:[%s867 + $0x1c] sm:$0xf]
    %v876 = vld [vmem:[%s867 + $0x20] sm:$0xf]
    %v877 = vld [vmem:[%s867 + $0x24] sm:$0xf]
    %v878 = vld [vmem:[%s867 + $0x28] sm:$0xf]
    %v879 = vld [vmem:[%s867 + $0x2c] sm:$0xf]
    %v880 = vld [vmem:[%s867 + $0x30] sm:$0xf]
    %v881 = vld [vmem:[%s867 + $0x34] sm:$0xf]
    %v882 = vld [vmem:[%s867 + $0x38] sm:$0xf]
    %v883 = vld [vmem:[%s867 + $0x3c] sm:$0xf]
    %s884 = scalar_lea.vmem %s2, 4
    %v885 = vld [vmem:[%s884] sm:$0x1]
    %v887 = vlaneseq
    %v888 = vshrl.u32 %v887, 7
    %v889 = vsub.s32 0, %v888
    %v890 = vrot.slane %v885, %v889
    %v908 = vunpack.c.l.b16 %v868
    %v909 = vunpack.c.l.b16 %v869
    %v910 = vunpack.c.l.b16 %v870
    %v911 = vunpack.c.l.b16 %v871
    %v912 = vunpack.c.l.b16 %v872
    %v913 = vunpack.c.l.b16 %v873
    %v914 = vunpack.c.l.b16 %v874
    %v915 = vunpack.c.l.b16 %v875
    %v916 = vunpack.c.l.b16 %v876
    %v917 = vunpack.c.l.b16 %v877
    %v918 = vunpack.c.l.b16 %v878
    %v919 = vunpack.c.l.b16 %v879
    %v920 = vunpack.c.l.b16 %v880
    %v921 = vunpack.c.l.b16 %v881
    %v922 = vunpack.c.l.b16 %v882
    %v923 = vunpack.c.l.b16 %v883
    %v924 = vpack.c.b16 %v909, %v908
    %v925 = vpack.c.b16 %v911, %v910
    %v926 = vpack.c.b16 %v913, %v912
    %v927 = vpack.c.b16 %v915, %v914
    %v928 = vpack.c.b16 %v917, %v916
    %v929 = vpack.c.b16 %v919, %v918
    %v930 = vpack.c.b16 %v921, %v920
    %v931 = vpack.c.b16 %v923, %v922
    %940 = vmatprep.subr.bf16.mxu0 0
    %941 = vmatpush1.bf16.msra.mxu0 %v924
    %942 = vmatprep.subr.bf16.mxu0 0
    %943 = vmatpush1.bf16.msra.mxu0 %v925
    %944 = vmatprep.subr.bf16.mxu0 0
    %945 = vmatpush1.bf16.msra.mxu0 %v926
    %946 = vmatprep.subr.bf16.mxu0 0
    %947 = vmatpush1.bf16.msra.mxu0 %v927
    %948 = vmatprep.subr.bf16.mxu0 0
    %949 = vmatpush1.bf16.msra.mxu0 %v928
    %950 = vmatprep.subr.bf16.mxu0 0
    %951 = vmatpush1.bf16.msra.mxu0 %v929
    %952 = vmatprep.subr.bf16.mxu0 0
    %953 = vmatpush1.bf16.msra.mxu0 %v930
    %954 = vmatprep.subr.bf16.mxu0 0
    %955 = vmatpush1.bf16.msra.mxu0 %v931
    %956 = vmatprep.subr.bf16.mxu0 0
    %957 = vmatpush1.bf16.msra.mxu0 0
    %958 = vmatprep.subr.bf16.mxu0 0
    %959 = vmatpush1.bf16.msra.mxu0 0
    %960 = vmatprep.subr.bf16.mxu0 0
    %961 = vmatpush1.bf16.msra.mxu0 0
    %962 = vmatprep.subr.bf16.mxu0 0
    %963 = vmatpush1.bf16.msra.mxu0 0
    %964 = vmatprep.subr.bf16.mxu0 0
    %965 = vmatpush1.bf16.msra.mxu0 0
    %966 = vmatprep.subr.bf16.mxu0 0
    %967 = vmatpush1.bf16.msra.mxu0 0
    %968 = vmatprep.subr.bf16.mxu0 0
    %969 = vmatpush1.bf16.msra.mxu0 0
    %970 = vmatprep.subr.bf16.mxu0 0
    %971 = vmatpush1.bf16.msra.mxu0 0
    %972 = vmatprep.mubr.bf16.mxu0 0
    %973 = vmatmul.mubr.bf16.gmra.mrb[0].mxu0 %v859
    %v974 = vpop.f32.mrb[0].mxu0
    %v975 = vadd.f32 %v890, %v974
    %v976 = vpop.f32.mrb[0].mxu0
    %v977 = vpop.f32.mrb[0].mxu0
    %v978 = vadd.f32 %v890, %v977
    %v979 = vpop.f32.mrb[0].mxu0
    %980 = vmatprep.mubr.bf16.mxu0 0
    %981 = vmatmul.mubr.bf16.gmra.mrb[0].mxu0 %v860
    %v982 = vpop.f32.mrb[0].mxu0
    %v983 = vadd.f32 %v890, %v982
    %v984 = vpop.f32.mrb[0].mxu0
    %v985 = vpop.f32.mrb[0].mxu0
    %v986 = vadd.f32 %v890, %v985
    %v987 = vpop.f32.mrb[0].mxu0
    %988 = vmatprep.mubr.bf16.mxu0 0
    %989 = vmatmul.mubr.bf16.gmra.mrb[0].mxu0 %v861
    %v990 = vpop.f32.mrb[0].mxu0
    %v991 = vadd.f32 %v890, %v990
    %v992 = vpop.f32.mrb[0].mxu0
    %v993 = vpop.f32.mrb[0].mxu0
    %v994 = vadd.f32 %v890, %v993
    %v995 = vpop.f32.mrb[0].mxu0
    %996 = vmatprep.mubr.bf16.mxu0 0
    %997 = vmatmul.mubr.bf16.gmra.mrb[0].mxu0 %v862
    %v998 = vpop.f32.mrb[0].mxu0
    %v999 = vadd.f32 %v890, %v998
    %v1000 = vpop.f32.mrb[0].mxu0
    %v1001 = vpop.f32.mrb[0].mxu0
    %v1002 = vadd.f32 %v890, %v1001
    %v1003 = vpop.f32.mrb[0].mxu0
    %1004 = vmatprep.mubr.bf16.mxu0 0
    %1005 = vmatmul.mubr.bf16.gmra.mrb[0].mxu0 %v863
    %v1006 = vpop.f32.mrb[0].mxu0
    %v1007 = vadd.f32 %v890, %v1006
    %v1008 = vpop.f32.mrb[0].mxu0
    %v1009 = vpop.f32.mrb[0].mxu0
    %v1010 = vadd.f32 %v890, %v1009
    %v1011 = vpop.f32.mrb[0].mxu0
    %1012 = vmatprep.mubr.bf16.mxu0 0
    %1013 = vmatmul.mubr.bf16.gmra.mrb[0].mxu0 %v864
    %v1014 = vpop.f32.mrb[0].mxu0
    %v1015 = vadd.f32 %v890, %v1014
    %v1016 = vpop.f32.mrb[0].mxu0
    %v1017 = vpop.f32.mrb[0].mxu0
    %v1018 = vadd.f32 %v890, %v1017
    %v1019 = vpop.f32.mrb[0].mxu0
    %1020 = vmatprep.mubr.bf16.mxu0 0
    %1021 = vmatmul.mubr.bf16.gmra.mrb[0].mxu0 %v865
    %v1022 = vpop.f32.mrb[0].mxu0
    %v1023 = vadd.f32 %v890, %v1022
    %v1024 = vpop.f32.mrb[0].mxu0
    %v1025 = vpop.f32.mrb[0].mxu0
    %v1026 = vadd.f32 %v890, %v1025
    %v1027 = vpop.f32.mrb[0].mxu0
    %1028 = vmatprep.mubr.bf16.mxu0 0
    %1029 = vmatmul.mubr.bf16.gmra.mrb[0].mxu0 %v866
    %v1030 = vpop.f32.mrb[0].mxu0
    %v1031 = vadd.f32 %v890, %v1030
    %v1032 = vpop.f32.mrb[0].mxu0
    %v1033 = vpop.f32.mrb[0].mxu0
    %v1034 = vadd.f32 %v890, %v1033
    %v1035 = vpop.f32.mrb[0].mxu0
    %1036 = vdwg.mxu0
    %v1037 = vmax.f32 %v975, 0.0
    %v1038 = vmax.f32 %v978, 0.0
    %v1039 = vmax.f32 %v983, 0.0
    %v1040 = vmax.f32 %v986, 0.0
    %v1041 = vmax.f32 %v991, 0.0
    %v1042 = vmax.f32 %v994, 0.0
    %v1043 = vmax.f32 %v999, 0.0
    %v1044 = vmax.f32 %v1002, 0.0
    %v1045 = vmax.f32 %v1007, 0.0
    %v1046 = vmax.f32 %v1010, 0.0
    %v1047 = vmax.f32 %v1015, 0.0
    %v1048 = vmax.f32 %v1018, 0.0
    %v1049 = vmax.f32 %v1023, 0.0
    %v1050 = vmax.f32 %v1026, 0.0
    %v1051 = vmax.f32 %v1031, 0.0
    %v1052 = vmax.f32 %v1034, 0.0
    %v1053 = vpack.c.bf16 %v1038, %v1037
    %v1054 = vpack.c.bf16 %v1040, %v1039
    %v1055 = vpack.c.bf16 %v1042, %v1041
    %v1056 = vpack.c.bf16 %v1044, %v1043
    %v1057 = vpack.c.bf16 %v1046, %v1045
    %v1058 = vpack.c.bf16 %v1048, %v1047
    %v1059 = vpack.c.bf16 %v1050, %v1049
    %v1060 = vpack.c.bf16 %v1052, %v1051
    %s1061 = scalar_lea.vmem [#allocation2], 320
    %v1062 = vld [vmem:[%s1061] sm:$0xf]
    %v1063 = vld [vmem:[%s1061 + $0x4] sm:$0xf]
    %v1064 = vld [vmem:[%s1061 + $0x8] sm:$0xf]
    %v1065 = vld [vmem:[%s1061 + $0xc] sm:$0xf]
    %v1066 = vld [vmem:[%s1061 + $0x10] sm:$0xf]
    %v1067 = vld [vmem:[%s1061 + $0x14] sm:$0xf]
    %v1068 = vld [vmem:[%s1061 + $0x18] sm:$0xf]
    %v1069 = vld [vmem:[%s1061 + $0x1c] sm:$0xf]
    %v1070 = vld [vmem:[%s1061 + $0x20] sm:$0xf]
    %v1071 = vld [vmem:[%s1061 + $0x24] sm:$0xf]
    %v1072 = vld [vmem:[%s1061 + $0x28] sm:$0xf]
    %v1073 = vld [vmem:[%s1061 + $0x2c] sm:$0xf]
    %v1074 = vld [vmem:[%s1061 + $0x30] sm:$0xf]
    %v1075 = vld [vmem:[%s1061 + $0x34] sm:$0xf]
    %v1076 = vld [vmem:[%s1061 + $0x38] sm:$0xf]
    %v1077 = vld [vmem:[%s1061 + $0x3c] sm:$0xf]
    %s1078 = scalar_lea.vmem %s2, 5
    %v1079 = vld [vmem:[%s1078] sm:$0x1]
    %v1081 = vlaneseq
    %v1082 = vshrl.u32 %v1081, 7
    %v1083 = vsub.s32 0, %v1082
    %v1084 = vrot.slane %v1079, %v1083
    %v1102 = vunpack.c.l.b16 %v1062
    %v1103 = vunpack.c.l.b16 %v1063
    %v1104 = vunpack.c.l.b16 %v1064
    %v1105 = vunpack.c.l.b16 %v1065
    %v1106 = vunpack.c.l.b16 %v1066
    %v1107 = vunpack.c.l.b16 %v1067
    %v1108 = vunpack.c.l.b16 %v1068
    %v1109 = vunpack.c.l.b16 %v1069
    %v1110 = vunpack.c.l.b16 %v1070
    %v1111 = vunpack.c.l.b16 %v1071
    %v1112 = vunpack.c.l.b16 %v1072
    %v1113 = vunpack.c.l.b16 %v1073
    %v1114 = vunpack.c.l.b16 %v1074
    %v1115 = vunpack.c.l.b16 %v1075
    %v1116 = vunpack.c.l.b16 %v1076
    %v1117 = vunpack.c.l.b16 %v1077
    %v1118 = vpack.c.b16 %v1103, %v1102
    %v1119 = vpack.c.b16 %v1105, %v1104
    %v1120 = vpack.c.b16 %v1107, %v1106
    %v1121 = vpack.c.b16 %v1109, %v1108
    %v1122 = vpack.c.b16 %v1111, %v1110
    %v1123 = vpack.c.b16 %v1113, %v1112
    %v1124 = vpack.c.b16 %v1115, %v1114
    %v1125 = vpack.c.b16 %v1117, %v1116
    %1134 = vmatprep.subr.bf16.mxu0 0
    %1135 = vmatpush1.bf16.msra.mxu0 %v1118
    %1136 = vmatprep.subr.bf16.mxu0 0
    %1137 = vmatpush1.bf16.msra.mxu0 %v1119
    %1138 = vmatprep.subr.bf16.mxu0 0
    %1139 = vmatpush1.bf16.msra.mxu0 %v1120
    %1140 = vmatprep.subr.bf16.mxu0 0
    %1141 = vmatpush1.bf16.msra.mxu0 %v1121
    %1142 = vmatprep.subr.bf16.mxu0 0
    %1143 = vmatpush1.bf16.msra.mxu0 %v1122
    %1144 = vmatprep.subr.bf16.mxu0 0
    %1145 = vmatpush1.bf16.msra.mxu0 %v1123
    %1146 = vmatprep.subr.bf16.mxu0 0
    %1147 = vmatpush1.bf16.msra.mxu0 %v1124
    %1148 = vmatprep.subr.bf16.mxu0 0
    %1149 = vmatpush1.bf16.msra.mxu0 %v1125
    %1150 = vmatprep.subr.bf16.mxu0 0
    %1151 = vmatpush1.bf16.msra.mxu0 0
    %1152 = vmatprep.subr.bf16.mxu0 0
    %1153 = vmatpush1.bf16.msra.mxu0 0
    %1154 = vmatprep.subr.bf16.mxu0 0
    %1155 = vmatpush1.bf16.msra.mxu0 0
    %1156 = vmatprep.subr.bf16.mxu0 0
    %1157 = vmatpush1.bf16.msra.mxu0 0
    %1158 = vmatprep.subr.bf16.mxu0 0
    %1159 = vmatpush1.bf16.msra.mxu0 0
    %1160 = vmatprep.subr.bf16.mxu0 0
    %1161 = vmatpush1.bf16.msra.mxu0 0
    %1162 = vmatprep.subr.bf16.mxu0 0
    %1163 = vmatpush1.bf16.msra.mxu0 0
    %1164 = vmatprep.subr.bf16.mxu0 0
    %1165 = vmatpush1.bf16.msra.mxu0 0
    %1166 = vmatprep.mubr.bf16.mxu0 0
    %1167 = vmatmul.mubr.bf16.gmra.mrb[0].mxu0 %v1053
    %v1168 = vpop.f32.mrb[0].mxu0
    %v1169 = vadd.f32 %v1084, %v1168
    %v1170 = vpop.f32.mrb[0].mxu0
    %v1171 = vpop.f32.mrb[0].mxu0
    %v1172 = vadd.f32 %v1084, %v1171
    %v1173 = vpop.f32.mrb[0].mxu0
    %1174 = vmatprep.mubr.bf16.mxu0 0
    %1175 = vmatmul.mubr.bf16.gmra.mrb[0].mxu0 %v1054
    %v1176 = vpop.f32.mrb[0].mxu0
    %v1177 = vadd.f32 %v1084, %v1176
    %v1178 = vpop.f32.mrb[0].mxu0
    %v1179 = vpop.f32.mrb[0].mxu0
    %v1180 = vadd.f32 %v1084, %v1179
    %v1181 = vpop.f32.mrb[0].mxu0
    %1182 = vmatprep.mubr.bf16.mxu0 0
    %1183 = vmatmul.mubr.bf16.gmra.mrb[0].mxu0 %v1055
    %v1184 = vpop.f32.mrb[0].mxu0
    %v1185 = vadd.f32 %v1084, %v1184
    %v1186 = vpop.f32.mrb[0].mxu0
    %v1187 = vpop.f32.mrb[0].mxu0
    %v1188 = vadd.f32 %v1084, %v1187
    %v1189 = vpop.f32.mrb[0].mxu0
    %1190 = vmatprep.mubr.bf16.mxu0 0
    %1191 = vmatmul.mubr.bf16.gmra.mrb[0].mxu0 %v1056
    %v1192 = vpop.f32.mrb[0].mxu0
    %v1193 = vadd.f32 %v1084, %v1192
    %v1194 = vpop.f32.mrb[0].mxu0
    %v1195 = vpop.f32.mrb[0].mxu0
    %v1196 = vadd.f32 %v1084, %v1195
    %v1197 = vpop.f32.mrb[0].mxu0
    %1198 = vmatprep.mubr.bf16.mxu0 0
    %1199 = vmatmul.mubr.bf16.gmra.mrb[0].mxu0 %v1057
    %v1200 = vpop.f32.mrb[0].mxu0
    %v1201 = vadd.f32 %v1084, %v1200
    %v1202 = vpop.f32.mrb[0].mxu0
    %v1203 = vpop.f32.mrb[0].mxu0
    %v1204 = vadd.f32 %v1084, %v1203
    %v1205 = vpop.f32.mrb[0].mxu0
    %1206 = vmatprep.mubr.bf16.mxu0 0
    %1207 = vmatmul.mubr.bf16.gmra.mrb[0].mxu0 %v1058
    %v1208 = vpop.f32.mrb[0].mxu0
    %v1209 = vadd.f32 %v1084, %v1208
    %v1210 = vpop.f32.mrb[0].mxu0
    %v1211 = vpop.f32.mrb[0].mxu0
    %v1212 = vadd.f32 %v1084, %v1211
    %v1213 = vpop.f32.mrb[0].mxu0
    %1214 = vmatprep.mubr.bf16.mxu0 0
    %1215 = vmatmul.mubr.bf16.gmra.mrb[0].mxu0 %v1059
    %v1216 = vpop.f32.mrb[0].mxu0
    %v1217 = vadd.f32 %v1084, %v1216
    %v1218 = vpop.f32.mrb[0].mxu0
    %v1219 = vpop.f32.mrb[0].mxu0
    %v1220 = vadd.f32 %v1084, %v1219
    %v1221 = vpop.f32.mrb[0].mxu0
    %1222 = vmatprep.mubr.bf16.mxu0 0
    %1223 = vmatmul.mubr.bf16.gmra.mrb[0].mxu0 %v1060
    %v1224 = vpop.f32.mrb[0].mxu0
    %v1225 = vadd.f32 %v1084, %v1224
    %v1226 = vpop.f32.mrb[0].mxu0
    %v1227 = vpop.f32.mrb[0].mxu0
    %v1228 = vadd.f32 %v1084, %v1227
    %v1229 = vpop.f32.mrb[0].mxu0
    %1230 = vdwg.mxu0
    %v1231 = vmax.f32 %v1169, 0.0
    %v1232 = vmax.f32 %v1172, 0.0
    %v1233 = vmax.f32 %v1177, 0.0
    %v1234 = vmax.f32 %v1180, 0.0
    %v1235 = vmax.f32 %v1185, 0.0
    %v1236 = vmax.f32 %v1188, 0.0
    %v1237 = vmax.f32 %v1193, 0.0
    %v1238 = vmax.f32 %v1196, 0.0
    %v1239 = vmax.f32 %v1201, 0.0
    %v1240 = vmax.f32 %v1204, 0.0
    %v1241 = vmax.f32 %v1209, 0.0
    %v1242 = vmax.f32 %v1212, 0.0
    %v1243 = vmax.f32 %v1217, 0.0
    %v1244 = vmax.f32 %v1220, 0.0
    %v1245 = vmax.f32 %v1225, 0.0
    %v1246 = vmax.f32 %v1228, 0.0
    %1247 = vst [vmem:[%s3] sm:$0xff] %v1231
    %1248 = vst [vmem:[%s3 + $0x8] sm:$0xff] %v1232
    %1249 = vst [vmem:[%s3 + $0x10] sm:$0xff] %v1233
    %1250 = vst [vmem:[%s3 + $0x18] sm:$0xff] %v1234
    %1251 = vst [vmem:[%s3 + $0x20] sm:$0xff] %v1235
    %1252 = vst [vmem:[%s3 + $0x28] sm:$0xff] %v1236
    %1253 = vst [vmem:[%s3 + $0x30] sm:$0xff] %v1237
    %1254 = vst [vmem:[%s3 + $0x38] sm:$0xff] %v1238
    %1255 = vst [vmem:[%s3 + $0x40] sm:$0xff] %v1239
    %1256 = vst [vmem:[%s3 + $0x48] sm:$0xff] %v1240
    %1257 = vst [vmem:[%s3 + $0x50] sm:$0xff] %v1241
    %1258 = vst [vmem:[%s3 + $0x58] sm:$0xff] %v1242
    %1259 = vst [vmem:[%s3 + $0x60] sm:$0xff] %v1243
    %1260 = vst [vmem:[%s3 + $0x68] sm:$0xff] %v1244
    %1261 = vst [vmem:[%s3 + $0x70] sm:$0xff] %v1245
    %1262 = vst [vmem:[%s3 + $0x78] sm:$0xff] %v1246
    // Predicated region
    $region18: #{layerwise_autoencoder_forward.1} parent=1 // pred_check
      _
    $region19: #{layerwise_autoencoder_forward.1} parent=1 // pred_check_branch
      %1264 = sbr.rel (0) target = $region21
    $region20: #{layerwise_autoencoder_forward.1} parent=1 // pred_region
      _
    $region21: #{layerwise_autoencoder_forward.1} parent=1 // pred_fallthru
      _
    // Predicated region
    $region22: #{layerwise_autoencoder_forward.1} parent=1 // pred_check
      _
    $region23: #{layerwise_autoencoder_forward.1} parent=1 // pred_check_branch
      %1266 = sbr.rel (0) target = $region25
    $region24: #{layerwise_autoencoder_forward.1} parent=1 // pred_region
      _
    $region25: #{layerwise_autoencoder_forward.1} parent=1 // pred_fallthru
      _
    %1267 = vsyncpa [#allocation3], 1

</llo_original>
